<compile_context>
chip_gen: v6e
topology: v6e:2x2x1
jax: 0.10.0
libtpu: 0.0.40
codegen_flags: <defaults>
</compile_context>

<pallas_src>
import functools

import jax
import jax.numpy as jnp
from jax import lax
from jax.experimental import pallas as pl
from jax.experimental.pallas import tpu as pltpu

LANE = 128
SUBLANE = 8
MAX_TILE_ROWS = 4096  # f32: 2 MiB per input tile; 2 inputs x 2 buffers = 8 MiB VMEM


def _partial_row(term):
    """Reduce a (tile_rows, 128) f32 tile to a (1, 128) lane-dense partial sum."""
    tr = term.shape[0]
    if tr > SUBLANE and tr % SUBLANE == 0:
        # Whole-vreg groups first (pure VPU adds), then one cross-sublane reduce (XLU).
        acc8 = term.reshape(-1, SUBLANE, LANE).sum(axis=0)
        return acc8.sum(axis=0, keepdims=True)
    return term.sum(axis=0, keepdims=True)


def _loss_kernel(p_ref, y_ref, o_ref, *, tile_rows, valid_rows, needs_mask):
    """Per-tile BCE partial sums -> (1, 128) output row (no carried accumulator)."""
    p = p_ref[...].astype(jnp.float32)
    y = y_ref[...].astype(jnp.float32)

    lp = jnp.log(jnp.clip(p, 1e-10, 1.0))
    lq = jnp.log(jnp.clip(1.0 - p, 1e-10, 1.0))
    # a == 1 - a == 0.5 is factored out (applied in the wrapper);
    # y*lp + (1-y)*lq  ==  lq + y*(lp - lq)   (saves ~3 VALU ops/elem).
    term = lq + y * (lp - lq)
    o_ref[...] = _partial_row(term)

    if needs_mask:
        # Only the last grid step can read past the end of the (rows, 128) array.
        # Recompute that single tile with out-of-range rows forced to the neutral
        # (p=1, y=1) pair, whose BCE term is exactly 0 (clip keeps log finite).
        @pl.when(pl.program_id(0) == pl.num_programs(0) - 1)
        def _():
            row = lax.broadcasted_iota(jnp.int32, (tile_rows, LANE), 0)
            g_row = pl.program_id(0) * tile_rows + row
            ok = g_row < valid_rows
            pm = jnp.where(ok, p, 1.0)
            ym = jnp.where(ok, y, 1.0)
            lpm = jnp.log(jnp.clip(pm, 1e-10, 1.0))
            lqm = jnp.log(jnp.clip(1.0 - pm, 1e-10, 1.0))
            o_ref[...] = _partial_row(lqm + ym * (lpm - lqm))


def my_loss(X, output, y_std):
    """Pallas equivalent of My_loss.forward. X is unused (matches PyTorch)."""
    del X  # not used by the reference forward pass

    a = 0.5
    # Kernel + final scale factor out a because a == (1 - a); guard that assumption.
    assert a == 0.5, "kernel assumes a == 1 - a; generalize the term if a changes"

    p = jnp.reshape(output, (-1,))
    y = jnp.reshape(y_std, (-1,))
    # Keep native floating dtypes (bf16 stays bf16, halving its HBM stream).
    if not jnp.issubdtype(p.dtype, jnp.floating):
        p = p.astype(jnp.float32)
    if jnp.issubdtype(y.dtype, jnp.bool_):
        y = y.astype(jnp.int8)  # 1 B/elem label stream; upcast to f32 inside the kernel
    elif not jnp.issubdtype(y.dtype, jnp.floating):
        y = y.astype(jnp.float32)
    n = p.shape[0]

    # Only a sub-128 ragged tail needs a (tiny) pad so the free (rows, 128) reshape is
    # legal; pad value 1.0/1 is the neutral (p=1, y=1) pair -> exact 0 contribution.
    # TODO(synk): this still copies both arrays when n % 128 != 0; a fully copy-free
    # path would need 1-D blocks with in-kernel lane masking.
    pad = (-n) % LANE
    if pad:
        p = jnp.pad(p, (0, pad), constant_values=1.0)
        y = jnp.pad(y, (0, pad), constant_values=1)
    rows = (n + pad) // LANE

    p2 = p.reshape(rows, LANE)  # contiguous reshape: no copy
    y2 = y.reshape(rows, LANE)

    if rows <= MAX_TILE_ROWS:
        tile_rows = rows        # single full-extent block (always a legal block shape)
        needs_mask = False
    else:
        tile_rows = MAX_TILE_ROWS                   # multiple of 8 (and of 32 for int8)
        needs_mask = (rows % MAX_TILE_ROWS) != 0    # last block overhangs the array
    num_tiles = pl.cdiv(rows, tile_rows)

    kernel = functools.partial(
        _loss_kernel, tile_rows=tile_rows, valid_rows=rows, needs_mask=needs_mask)

    partials = pl.pallas_call(
        kernel,
        out_shape=jax.ShapeDtypeStruct((num_tiles, LANE), jnp.float32),
        grid_spec=pltpu.PrefetchScalarGridSpec(
            num_scalar_prefetch=0,
            grid=(num_tiles,),
            in_specs=[pl.BlockSpec((tile_rows, LANE), lambda i: (i, 0)),
                      pl.BlockSpec((tile_rows, LANE), lambda i: (i, 0))],
            out_specs=pl.BlockSpec((1, LANE), lambda i: (i, 0)),
        ),
        compiler_params=pltpu.CompilerParams(
            dimension_semantics=("parallel",)),  # independent tiles -> both TCs on v7x
    )(p2, y2)

    # Tiny final reduction (num_tiles x 128 elements) + the factored -a * sum / N scale.
    total = jnp.sum(partials)
    return -(jnp.float32(a) * total / jnp.float32(n))


def my_loss_ref(X, output, y_std):
    """Pure-JAX reference mirroring the PyTorch forward."""
    del X
    a = 0.5
    p = jnp.reshape(output, (-1, 1)).astype(jnp.float32)
    y = jnp.reshape(y_std, (-1, 1)).astype(jnp.float32)
    t = (a * y * jnp.log(jnp.clip(p, 1e-10, 1.0))
         + (1.0 - a) * (1.0 - y) * jnp.log(jnp.clip(1.0 - p, 1e-10, 1.0)))
    return -jnp.mean(t)


if __name__ == "__main__":
    key = jax.random.PRNGKey(0)
    kx, kp, ky = jax.random.split(key, 3)

    # Small shapes consistent with the forward: X is auxiliary/unused,
    # `output` are probabilities, `y_std` are binary-ish targets.
    X = jax.random.normal(kx, (2, 4, 16, 16), dtype=jnp.float32)
    output = jax.nn.sigmoid(jax.random.normal(kp, (2, 1, 16, 16), dtype=jnp.float32))
    y_std = (jax.random.uniform(ky, (2, 1, 16, 16)) > 0.5).astype(jnp.float32)

    loss = jax.block_until_ready(my_loss(X, output, y_std))
    ref = jax.block_until_ready(my_loss_ref(X, output, y_std))

    assert jnp.allclose(loss, ref, rtol=1e-5, atol=1e-6), (loss, ref)
    print("KERNEL_OK")
</pallas_src>

<mosaic_0001>
module attributes {stable_mosaic.version = 11 : i64} {
  func.func @_loss_kernel(%arg0: i32, %arg1: memref<4x128xf32, #tpu.memory_space<vmem>>, %arg2: memref<4x128xf32, #tpu.memory_space<vmem>>, %arg3: memref<1x128xf32, #tpu.memory_space<vmem>>) attributes {dimension_semantics = [#tpu.dimension_semantics<parallel>], iteration_bounds = array<i64: 1>, scalar_prefetch = 0 : i64, scratch_operands = 0 : i64, tpu.core_type = #tpu.core_type<tc>, window_params = [{transform_indices = @transform_0, window_bounds = array<i64: 4, 128>}, {transform_indices = @transform_1, window_bounds = array<i64: 4, 128>}, {transform_indices = @transform_2, window_bounds = array<i64: 1, 128>}]} {
    %c0 = arith.constant 0 : index
    %c0_0 = arith.constant 0 : index
    %0 = vector.load %arg1[%c0, %c0_0] : memref<4x128xf32, #tpu.memory_space<vmem>>, vector<4x128xf32>
    %c0_1 = arith.constant 0 : index
    %c0_2 = arith.constant 0 : index
    %1 = vector.load %arg2[%c0_1, %c0_2] : memref<4x128xf32, #tpu.memory_space<vmem>>, vector<4x128xf32>
    %cst = arith.constant 1.000000e-10 : f32
    %cst_3 = arith.constant 1.000000e+00 : f32
    %2 = vector.broadcast %cst : f32 to vector<4x128xf32>
    %3 = arith.maximumf %2, %0 : vector<4x128xf32>
    %4 = vector.broadcast %cst_3 : f32 to vector<4x128xf32>
    %5 = arith.minimumf %4, %3 : vector<4x128xf32>
    %6 = math.log %5 : vector<4x128xf32>
    %cst_4 = arith.constant 1.000000e+00 : f32
    %7 = vector.broadcast %cst_4 : f32 to vector<4x128xf32>
    %8 = arith.subf %7, %0 : vector<4x128xf32>
    %cst_5 = arith.constant 1.000000e-10 : f32
    %cst_6 = arith.constant 1.000000e+00 : f32
    %9 = vector.broadcast %cst_5 : f32 to vector<4x128xf32>
    %10 = arith.maximumf %9, %8 : vector<4x128xf32>
    %11 = vector.broadcast %cst_6 : f32 to vector<4x128xf32>
    %12 = arith.minimumf %11, %10 : vector<4x128xf32>
    %13 = math.log %12 : vector<4x128xf32>
    %14 = arith.subf %6, %13 : vector<4x128xf32>
    %15 = arith.mulf %1, %14 : vector<4x128xf32>
    %16 = arith.addf %13, %15 : vector<4x128xf32>
    %cst_7 = arith.constant dense<0.000000e+00> : vector<128xf32>
    %17 = vector.multi_reduction <add>, %16, %cst_7 [0] : vector<4x128xf32> to vector<128xf32>
    %18 = vector.shape_cast %17 : vector<128xf32> to vector<1x128xf32>
    %c0_8 = arith.constant 0 : index
    %c0_9 = arith.constant 0 : index
    %19 = vector.load %arg3[%c0_8, %c0_9] : memref<1x128xf32, #tpu.memory_space<vmem>>, vector<1x128xf32>
    tpu.vector_store %arg3[%c0_8, %c0_9], %18 {strides = array<i32>} : memref<1x128xf32, #tpu.memory_space<vmem>>, vector<1x128xf32>,
    return
  }
  func.func @transform_0(%arg0: i32) -> (i32, i32) {
    %c0_i32 = arith.constant 0 : i32
    %c0_i32_0 = arith.constant 0 : i32
    return %arg0, %c0_i32 : i32, i32
  }
  func.func @transform_1(%arg0: i32) -> (i32, i32) {
    %c0_i32 = arith.constant 0 : i32
    %c0_i32_0 = arith.constant 0 : i32
    return %arg0, %c0_i32 : i32, i32
  }
  func.func @transform_2(%arg0: i32) -> (i32, i32) {
    %c0_i32 = arith.constant 0 : i32
    %c0_i32_0 = arith.constant 0 : i32
    return %arg0, %c0_i32 : i32, i32
  }
}

</mosaic_0001>

<llo_original>
// kernel: tpu_custom_call.1
$region0: #{tpu_custom_call.1}
  #allocation0 [shape = 'u32[]', space=smem, size = 0x4, offset = 0x4, fixed_abs, tag = 'smem constant byte address 0x4 - core index']
  #allocation1 [shape = 'u32[144,128]{1,0:T(1,128)}', space=vmem, size = 0x12000, scoped, tag = 'internal scratch']
  %s0 = inlined_call_operand.hbm [shape: f32[4,128], index: 0, kind: input, shape index: {}]
  %s1 = inlined_call_operand.hbm [shape: f32[4,128], index: 1, kind: input, shape index: {}]
  %s2 = inlined_call_operand.hbm [shape: f32[1,128], index: 2, kind: output, shape index: {}]
  %s3 = sld [smem:[#allocation0]]
  $region26: #{tpu_custom_call.1} parent=0
    _
  %s5 = ssub.s32 1, %s3
  %s6 = scalar_select 0, %s5, %s3
  $region1: #{tpu_custom_call.1} parent=0
    #allocation2 [shape = 'u8[2048]{0}', space=vmem, size = 0x800, scoped, tag = 'input window, operand 0, single buffered']
    #allocation3 [shape = 's32[1]{0}', space=sflag, size = 0x4, scoped, tag = 'scoped memory for tpu_custom_call.1']
    #allocation4 [shape = 's32[1]{0}', space=sflag, size = 0x4, scoped, tag = 'scoped memory for tpu_custom_call.1']
    #allocation5 [shape = 'u8[2048]{0}', space=vmem, size = 0x800, scoped, tag = 'input window, operand 1, single buffered']
    #allocation6 [shape = 's32[1]{0}', space=sflag, size = 0x4, scoped, tag = 'scoped memory for tpu_custom_call.1']
    #allocation7 [shape = 'u8[512]{0}', space=vmem, size = 0x400, scoped, tag = 'output window, operand 0, single buffered']
    %7 = vsyncpa [#allocation3], 0
    %8 = vsyncpa [#allocation6], 0
    %9 = vsyncpa [#allocation4], 0
    // Predicated region
    $region2: #{tpu_custom_call.1} parent=1 // pred_check
      _
    $region3: #{tpu_custom_call.1} parent=1 // pred_check_branch
      %11 = sbr.rel (0) target = $region5
    $region4: #{tpu_custom_call.1} parent=1 // pred_region
      %s13 = ssub.s32 64, 64
      %14 = vsyncadd [#allocation3], %s13
      %s16 = sshll.u32 [#allocation2], 4
      %s17 = int_to_ptr.vmem [resolvable:$true] %s16
      %19 = dma.hbm_to_vmem [thread:$0]  %s0, 64, %s17, [#allocation3]
    $region5: #{tpu_custom_call.1} parent=1 // pred_fallthru
      _
    // Predicated region
    $region6: #{tpu_custom_call.1} parent=1 // pred_check
      _
    $region7: #{tpu_custom_call.1} parent=1 // pred_check_branch
      %21 = sbr.rel (0) target = $region9
    $region8: #{tpu_custom_call.1} parent=1 // pred_region
      %s23 = ssub.s32 64, 64
      %24 = vsyncadd [#allocation6], %s23
      %s26 = sshll.u32 [#allocation5], 4
      %s27 = int_to_ptr.vmem [resolvable:$true] %s26
      %29 = dma.hbm_to_vmem [thread:$0]  %s1, 64, %s27, [#allocation6]
    $region9: #{tpu_custom_call.1} parent=1 // pred_fallthru
      _
    // Predicated region
    $region10: #{tpu_custom_call.1} parent=1 // pred_check
      _
    $region11: #{tpu_custom_call.1} parent=1 // pred_check_branch
      %31 = sbr.rel (0) target = $region13
    $region12: #{tpu_custom_call.1} parent=1 // pred_region
      %32 = dma.done [#allocation3], 64
    $region13: #{tpu_custom_call.1} parent=1 // pred_fallthru
      _
    // Predicated region
    $region14: #{tpu_custom_call.1} parent=1 // pred_check
      _
    $region15: #{tpu_custom_call.1} parent=1 // pred_check_branch
      %34 = sbr.rel (0) target = $region17
    $region16: #{tpu_custom_call.1} parent=1 // pred_region
      %35 = dma.done [#allocation6], 64
    $region17: #{tpu_custom_call.1} parent=1 // pred_fallthru
      _
    %v36 = vld [vmem:[#allocation2] sm:$0xf]
    %v37 = vld [vmem:[#allocation5] sm:$0xf]
    %v38 = vmax.f32 %v36, 1e-10
    %v39 = vmin.f32 %v38, 1.0
    %v40 = vlog2.pop %v39
    %v41 = vmul.f32 %v40, 0.6931472
    %v42 = vsub.f32 1.0, %v36
    %v43 = vmax.f32 %v42, 1e-10
    %v44 = vmin.f32 %v43, 1.0
    %v45 = vlog2.pop %v44
    %v46 = vmul.f32 %v45, 0.6931472
    %v47 = vsub.f32 %v41, %v46
    %v48 = vmul.f32 %v37, %v47
    %v49 = vadd.f32 %v46, %v48
    %vm50 = vcmask 1043456
    %v51 = vsel %vm50, %v49, 0.0
    %v52 = vrot.slane %v51, 4
    %v53 = vadd.f32 %v51, %v52
    %v54 = vrot.slane %v53, 2
    %v55 = vadd.f32 %v53, %v54
    %v56 = vrot.slane %v55, 1
    %v57 = vadd.f32 %v55, %v56
    %58 = vst [vmem:[#allocation7] sm:$0x1] %v57
    // Predicated region
    $region18: #{tpu_custom_call.1} parent=1 // pred_check
      _
    $region19: #{tpu_custom_call.1} parent=1 // pred_check_branch
      %60 = sbr.rel (0) target = $region21
    $region20: #{tpu_custom_call.1} parent=1 // pred_region
      %s62 = ssub.s32 16, 16
      %63 = vsyncadd [#allocation4], %s62
      %s65 = sshll.u32 [#allocation7], 4
      %s66 = int_to_ptr.vmem [resolvable:$true] %s65
      %68 = dma.vmem_to_hbm [thread:$0]  %s66, 16, %s2, [#allocation4]
    $region21: #{tpu_custom_call.1} parent=1 // pred_fallthru
      _
    // Predicated region
    $region22: #{tpu_custom_call.1} parent=1 // pred_check
      _
    $region23: #{tpu_custom_call.1} parent=1 // pred_check_branch
      %70 = sbr.rel (0) target = $region25
    $region24: #{tpu_custom_call.1} parent=1 // pred_region
      %71 = dma.done [#allocation4], 16
    $region25: #{tpu_custom_call.1} parent=1 // pred_fallthru
      _
    %72 = vsyncpa [#allocation3], 1
    %73 = vsyncpa [#allocation6], 1
    %74 = vsyncpa [#allocation4], 1

</llo_original>
